<compile_context>
chip_gen: v7x
topology: tpu7x:2x2x1
jax: 0.10.0
libtpu: 0.0.40
codegen_flags: <defaults>
</compile_context>

<pallas_src>
import jax
import jax.numpy as jnp
from jax.experimental import pallas as pl
from jax.experimental.pallas import tpu as pltpu

EPS = 1e-5


def _round_up(x, m):
    return (x + m - 1) // m * m


def _cdiv(a, b):
    return -(-a // b)


# --------------------------------- kernels ------------------------------------
def _matmul_stats_kernel(p_ref, w_ref, y_ref, s_ref, q_ref):
    """y = p @ w as one fused MXU GEMM (f32 accumulation).  Epilogue: per-tile
    per-channel sum / sum-of-squares from the f32 accumulator (two-phase BN),
    y stored in y_ref.dtype (bf16 on the fast path -> half the HBM traffic)."""
    y = jnp.dot(p_ref[...], w_ref[...], preferred_element_type=jnp.float32)
    y_ref[...] = y.astype(y_ref.dtype)
    s_ref[0] = jnp.sum(y, axis=0, keepdims=True)
    q_ref[0] = jnp.sum(y * y, axis=0, keepdims=True)


def _bn_add_act_kernel(y_ref, a_ref, b_ref, sc_ref, o_ref):
    """o = relu(bn2(y) + shortcut)      (identity shortcut; f32 VPU math)"""
    o_ref[...] = jnp.maximum(
        y_ref[...].astype(jnp.float32) * a_ref[...] + b_ref[...]
        + sc_ref[...].astype(jnp.float32), 0.0).astype(o_ref.dtype)


def _bn_bn_add_act_kernel(y_ref, a_ref, b_ref, ys_ref, as_ref, bs_ref, o_ref):
    """o = relu(bn2(y) + bn_s(y_s))     (projection shortcut; both BN applies fused)"""
    o_ref[...] = jnp.maximum(
        y_ref[...].astype(jnp.float32) * a_ref[...] + b_ref[...]
        + ys_ref[...].astype(jnp.float32) * as_ref[...] + bs_ref[...],
        0.0).astype(o_ref.dtype)


# ------------------------------ tile planning ----------------------------------
def _vmem_capacity_bytes():
    try:
        return int(pltpu.get_tpu_info().vmem_capacity_bytes)
    except Exception:
        return 64 * 1024 * 1024          # conservative default (v7x: 64 MiB / TC)


def _plan_tiles(m, k, co, in_elt, y_elt, tm_cap=1024):
    """Choose (tm, mp, vmem_limit_bytes) for the M-row grid.

    Per-grid-step working set (BlockSpec pipeline double-buffers each operand):
        2*tm*k*in_elt (patch tile) + 2*k*co*in_elt (weights)
      + 2*tm*co*y_elt (GEMM output) + stats (negligible).
    tm minimises row padding: split m into the fewest tiles that fit the cap,
    instead of round_up(m, cap) (which can nearly double work for awkward m).
    """
    capacity = _vmem_capacity_bytes()
    budget = int(capacity * 0.6)                     # headroom for compiler scratch
    weight_bytes = 2 * k * co * in_elt
    per_row = 2 * k * in_elt + 2 * co * y_elt
    tm_fit = max(8, (budget - weight_bytes) // max(per_row, 1))
    cap = max(8, (min(int(tm_cap), int(tm_fit)) // 8) * 8)
    nt = _cdiv(m, cap)
    tm = _round_up(_cdiv(m, nt), 8)
    mp = nt * tm
    need = weight_bytes + tm * per_row + (1 << 20)
    vmem_limit = int(min(max(2 * need, 32 * 1024 * 1024), int(capacity * 0.9)))
    return tm, mp, vmem_limit


# ----------------------------- pallas_call wrappers ----------------------------
def _conv_gemm_stats(patches, w_mat, tm, y_dtype, vmem_limit):
    """Tiled (Mp, K) @ (K, Co) GEMM with per-tile BN partial statistics."""
    mp, k = patches.shape
    co = w_mat.shape[1]
    t = mp // tm
    y, s, q = pl.pallas_call(
        _matmul_stats_kernel,
        grid=(t,),
        in_specs=[
            pl.BlockSpec((tm, k), lambda i: (i, 0)),
            # Grid-invariant weight block: stays resident in VMEM across steps.
            pl.BlockSpec((k, co), lambda i: (0, 0)),
        ],
        out_specs=(pl.BlockSpec((tm, co), lambda i: (i, 0)),
                   pl.BlockSpec((1, 1, co), lambda i: (i, 0, 0)),
                   pl.BlockSpec((1, 1, co), lambda i: (i, 0, 0))),
        out_shape=(jax.ShapeDtypeStruct((mp, co), y_dtype),
                   jax.ShapeDtypeStruct((t, 1, co), jnp.float32),
                   jax.ShapeDtypeStruct((t, 1, co), jnp.float32)),
        compiler_params=pltpu.CompilerParams(
            dimension_semantics=("parallel",),
            vmem_limit_bytes=vmem_limit),
    )(patches, w_mat)
    # Tiny cross-tile reduction of the partial statistics (per-channel, cheap).
    return y, jnp.sum(s, axis=(0, 1)), jnp.sum(q, axis=(0, 1))


def _pointwise(kernel, inputs, co, out_dtype, tm, vmem_limit):
    """Tiled element-wise pass over M rows (BN apply / shortcut add / ReLU)."""
    mp = inputs[0].shape[0]
    t = mp // tm
    in_specs = []
    for arr in inputs:
        if arr.shape[0] == mp:           # row-tiled operand
            in_specs.append(pl.BlockSpec((tm, arr.shape[1]), lambda i: (i, 0)))
        else:                            # per-channel (1, C) scale / shift
            in_specs.append(pl.BlockSpec(arr.shape, lambda i: (0, 0)))
    return pl.pallas_call(
        kernel,
        grid=(t,),
        in_specs=in_specs,
        out_specs=pl.BlockSpec((tm, co), lambda i: (i, 0)),
        out_shape=jax.ShapeDtypeStruct((mp, co), out_dtype),
        compiler_params=pltpu.CompilerParams(
            dimension_semantics=("parallel",),
            vmem_limit_bytes=vmem_limit),
    )(*inputs)


# ------------------------------ JAX-side glue ----------------------------------
def _im2col_3x3(x_nhwc, stride, dtype):
    """(N,H,W,C) -> (N*Ho*Wo, 9*C) patches for a 3x3 / pad-1 conv (layout glue).

    TODO(synk): replace with in-kernel halo-band construction (pl.ANY + manual
    DMA) to drop the 9x HBM slab entirely."""
    n, h, w, c = x_nhwc.shape
    ho = (h - 1) // stride + 1
    wo = (w - 1) // stride + 1
    xp = jnp.pad(x_nhwc, ((0, 0), (1, 1), (1, 1), (0, 0))).astype(dtype)
    cols = []
    for di in range(3):
        for dj in range(3):
            sl = xp[:, di:di + stride * (ho - 1) + 1:stride,
                    dj:dj + stride * (wo - 1) + 1:stride, :]
            cols.append(sl.reshape(n * ho * wo, c))
    return jnp.concatenate(cols, axis=1)       # tap-major / channel-minor K order


def _pad_rows(a, mp):
    return jnp.pad(a, ((0, mp - a.shape[0]), (0, 0)))


def _fold_bn(sum_y, sum_yy, count, gamma, beta):
    """Global sum / sum-of-squares -> per-channel scale & shift (tiny glue).
    Note: E[y^2]-E[y]^2 in f32; clamped at 0 (cancellation caveat documented)."""
    mean = sum_y / count
    var = jnp.maximum(sum_yy / count - mean * mean, 0.0)
    scale = gamma * jax.lax.rsqrt(var + EPS)
    shift = beta - mean * scale
    return (scale.reshape(1, -1).astype(jnp.float32),
            shift.reshape(1, -1).astype(jnp.float32))


def basic_block_forward(x_nchw, params, stride=1,
                        mxu_dtype=jnp.bfloat16, tm_cap=1024):
    x = jnp.transpose(x_nchw, (0, 2, 3, 1)).astype(jnp.float32)   # NCHW -> NHWC
    n, h, w, cin = x.shape
    planes = params["w1"].shape[0]
    ho = (h - 1) // stride + 1
    wo = (w - 1) // stride + 1
    m = n * ho * wo

    elt = jnp.dtype(mxu_dtype).itemsize
    # One plan for the whole block, sized for the largest GEMM working set.
    tm, mp, vmem_limit = _plan_tiles(m, 9 * max(cin, planes), planes,
                                     in_elt=elt, y_elt=elt, tm_cap=tm_cap)

    # ---- conv1: fused 3x3 im2col GEMM + BN1 batch statistics ------------------
    # Zero row-padding is harmless: padded rows give y == 0, so partial sums are
    # unaffected (the fold divides by the true m).
    w1 = jnp.transpose(params["w1"], (2, 3, 1, 0)).reshape(9 * cin, planes)
    p1 = _pad_rows(_im2col_3x3(x, stride, mxu_dtype), mp)
    y1, s1, q1 = _conv_gemm_stats(p1, w1.astype(mxu_dtype), tm, mxu_dtype, vmem_limit)
    a1, b1 = _fold_bn(s1, q1, m, params["g1"], params["b1"])

    # ---- BN1 + ReLU fused into conv2 patch production --------------------------
    # No dedicated Pallas pass and no h1 HBM buffer: this elementwise expression
    # fuses (XLA loop fusion) into the pad/slice/concat producing conv2's im2col
    # slab, so y1 (bf16) is read once and only the slab is written.
    h1 = jnp.maximum(y1[:m].astype(jnp.float32) * a1 + b1, 0.0).astype(mxu_dtype)
    h1_img = h1.reshape(n, ho, wo, planes)

    # ---- conv2: fused 3x3 im2col GEMM + BN2 batch statistics -------------------
    w2 = jnp.transpose(params["w2"], (2, 3, 1, 0)).reshape(9 * planes, planes)
    p2 = _pad_rows(_im2col_3x3(h1_img, 1, mxu_dtype), mp)
    y2, s2, q2 = _conv_gemm_stats(p2, w2.astype(mxu_dtype), tm, mxu_dtype, vmem_limit)
    a2, b2 = _fold_bn(s2, q2, m, params["g2"], params["b2"])

    # ---- shortcut + BN2 apply + add + ReLU (single fused pass) -----------------
    if "wsc" in params:
        # Projection: 1x1 conv via the same GEMM+stats kernel (ysc kept in the
        # MXU dtype -> no f32 round trip); its BN apply is fused below.
        xsc = x[:, ::stride, ::stride, :].reshape(m, cin)
        wsc = jnp.transpose(params["wsc"][:, :, 0, 0], (1, 0))      # (cin, planes)
        ysc, ss, qs = _conv_gemm_stats(_pad_rows(xsc.astype(mxu_dtype), mp),
                                       wsc.astype(mxu_dtype), tm, mxu_dtype,
                                       vmem_limit)
        asc, bsc = _fold_bn(ss, qs, m, params["gs"], params["bs"])
        out = _pointwise(_bn_bn_add_act_kernel,
                         [y2, a2, b2, ysc, asc, bsc],
                         planes, jnp.float32, tm, vmem_limit)
    else:
        # Identity shortcut: read in the MXU dtype (halves the pass's input
        # traffic); add/ReLU math stays in f32 vregs.
        sc = _pad_rows(x.reshape(m, cin).astype(mxu_dtype), mp)
        out = _pointwise(_bn_add_act_kernel, [y2, a2, b2, sc],
                         planes, jnp.float32, tm, vmem_limit)

    out = out[:m].reshape(n, ho, wo, planes)
    return jnp.transpose(out, (0, 3, 1, 2))                         # NHWC -> NCHW


# --------------------------- pure-JAX reference --------------------------------
def _bn_ref(x, gamma, beta):
    mean = jnp.mean(x, axis=(0, 1, 2), keepdims=True)
    var = jnp.mean((x - mean) ** 2, axis=(0, 1, 2), keepdims=True)
    return (x - mean) * jax.lax.rsqrt(var + EPS) * gamma + beta


def _conv_ref(x, w, stride, pad):
    return jax.lax.conv_general_dilated(
        x, jnp.transpose(w, (2, 3, 1, 0)), (stride, stride),
        [(pad, pad), (pad, pad)],
        dimension_numbers=("NHWC", "HWIO", "NHWC"),
        precision=jax.lax.Precision.HIGHEST)


def basic_block_ref(x_nchw, params, stride=1):
    x = jnp.transpose(x_nchw, (0, 2, 3, 1)).astype(jnp.float32)
    out = jax.nn.relu(_bn_ref(_conv_ref(x, params["w1"], stride, 1),
                              params["g1"], params["b1"]))
    out = _bn_ref(_conv_ref(out, params["w2"], 1, 1), params["g2"], params["b2"])
    if "wsc" in params:
        sc = _bn_ref(_conv_ref(x, params["wsc"], stride, 0),
                     params["gs"], params["bs"])
    else:
        sc = x
    out = jax.nn.relu(out + sc)
    return jnp.transpose(out, (0, 3, 1, 2))


# ------------------------------ param init -------------------------------------
def init_params(key, in_planes, planes, stride):
    ks = jax.random.split(key, 9)
    p = {
        "w1": 0.1 * jax.random.normal(ks[0], (planes, in_planes, 3, 3), jnp.float32),
        "g1": 1.0 + 0.1 * jax.random.normal(ks[1], (planes,), jnp.float32),
        "b1": 0.1 * jax.random.normal(ks[2], (planes,), jnp.float32),
        "w2": 0.1 * jax.random.normal(ks[3], (planes, planes, 3, 3), jnp.float32),
        "g2": 1.0 + 0.1 * jax.random.normal(ks[4], (planes,), jnp.float32),
        "b2": 0.1 * jax.random.normal(ks[5], (planes,), jnp.float32),
    }
    if stride != 1 or in_planes != planes:
        p["wsc"] = 0.1 * jax.random.normal(ks[6], (planes, in_planes, 1, 1), jnp.float32)
        p["gs"] = 1.0 + 0.1 * jax.random.normal(ks[7], (planes,), jnp.float32)
        p["bs"] = 0.1 * jax.random.normal(ks[8], (planes,), jnp.float32)
    return p


if __name__ == "__main__":
    key = jax.random.PRNGKey(0)
    kx, kp1, kp2, kp3 = jax.random.split(key, 4)

    x = jax.random.normal(kx, (2, 4, 16, 16), jnp.float32)   # NCHW, like PyTorch

    configs = [
        ("projection s=1", init_params(kp1, 4, 8, 1), 1, (2, 8, 16, 16)),
        ("identity   s=1", init_params(kp2, 4, 4, 1), 1, (2, 4, 16, 16)),
        ("projection s=2", init_params(kp3, 4, 8, 2), 2, (2, 8, 8, 8)),
    ]

    def _check(out, ref, atol, rtol, name):
        err = jnp.abs(out - ref)
        ok = bool(jnp.all(err <= atol + rtol * jnp.abs(ref)))
        assert ok, (name, float(jnp.max(err)))

    # Fast path: bf16 MXU operands and bf16 intermediates, f32 accumulation and
    # f32 BN statistics.  Mixed tolerance covers bf16 rounding (~2^-9 relative)
    # chained through two GEMM + BN stages plus the bf16 shortcut read.
    for name, p, s, shape in configs:
        out = jax.block_until_ready(basic_block_forward(x, p, stride=s))
        ref = basic_block_ref(x, p, stride=s)
        assert out.shape == shape, (name, out.shape)
        _check(out, ref, 5e-2, 3e-2, name + " [bf16]")

    # Tighter check: identical kernels with f32 operands/intermediates.
    for name, p, s, shape in configs:
        out = jax.block_until_ready(
            basic_block_forward(x, p, stride=s, mxu_dtype=jnp.float32))
        ref = basic_block_ref(x, p, stride=s)
        _check(out, ref, 2e-2, 1e-2, name + " [f32]")

    print("KERNEL_OK")
</pallas_src>

<mosaic_0001>
module attributes {stable_mosaic.version = 11 : i64} {
  func.func @_matmul_stats_kernel(%arg0: i32, %arg1: memref<512x36xbf16, #tpu.memory_space<vmem>>, %arg2: memref<36x8xbf16, #tpu.memory_space<vmem>>, %arg3: memref<512x8xbf16, #tpu.memory_space<vmem>>, %arg4: memref<1x1x8xf32, #tpu.memory_space<vmem>>, %arg5: memref<1x1x8xf32, #tpu.memory_space<vmem>>) attributes {dimension_semantics = [#tpu.dimension_semantics<parallel>], iteration_bounds = array<i64: 1>, scalar_prefetch = 0 : i64, scratch_operands = 0 : i64, tpu.core_type = #tpu.core_type<tc>, window_params = [{transform_indices = @transform_0, window_bounds = array<i64: 512, 36>}, {pipeline_mode = #tpu.pipeline_mode<synchronous>, transform_indices = @transform_1, window_bounds = array<i64: 36, 8>}, {transform_indices = @transform_2, window_bounds = array<i64: 512, 8>}, {transform_indices = @transform_3, window_bounds = array<i64: 1, 1, 8>}, {transform_indices = @transform_4, window_bounds = array<i64: 1, 1, 8>}]} {
    %c0 = arith.constant 0 : index
    %c0_0 = arith.constant 0 : index
    %0 = vector.load %arg1[%c0, %c0_0] : memref<512x36xbf16, #tpu.memory_space<vmem>>, vector<512x36xbf16>
    %c0_1 = arith.constant 0 : index
    %c0_2 = arith.constant 0 : index
    %1 = vector.load %arg2[%c0_1, %c0_2] : memref<36x8xbf16, #tpu.memory_space<vmem>>, vector<36x8xbf16>
    %cst = arith.constant dense<0.000000e+00> : vector<512x8xf32>
    %2 = tpu.matmul %0, %1, %cst {dimension_numbers = #tpu.dot_dimension_numbers<[1], [0], [0], [1], [0, 0, 1, 1], [], []>} : vector<512x36xbf16>, vector<36x8xbf16>, vector<512x8xf32> -> vector<512x8xf32>
    %3 = arith.truncf %2 : vector<512x8xf32> to vector<512x8xbf16>
    %c0_3 = arith.constant 0 : index
    %c0_4 = arith.constant 0 : index
    %4 = vector.load %arg3[%c0_3, %c0_4] : memref<512x8xbf16, #tpu.memory_space<vmem>>, vector<512x8xbf16>
    tpu.vector_store %arg3[%c0_3, %c0_4], %3 {strides = array<i32>} : memref<512x8xbf16, #tpu.memory_space<vmem>>, vector<512x8xbf16>,
    %cst_5 = arith.constant dense<0.000000e+00> : vector<8xf32>
    %5 = vector.multi_reduction <add>, %2, %cst_5 [0] : vector<512x8xf32> to vector<8xf32>
    %6 = vector.shape_cast %5 : vector<8xf32> to vector<1x8xf32>
    %c0_6 = arith.constant 0 : index
    %c0_7 = arith.constant 0 : index
    %c0_8 = arith.constant 0 : index
    %7 = vector.load %arg4[%c0_6, %c0_7, %c0_8] : memref<1x1x8xf32, #tpu.memory_space<vmem>>, vector<1x1x8xf32>
    %8 = vector.shape_cast %7 : vector<1x1x8xf32> to vector<1x8xf32>
    %9 = vector.shape_cast %6 : vector<1x8xf32> to vector<1x1x8xf32>
    tpu.vector_store %arg4[%c0_6, %c0_7, %c0_8], %9 {strides = array<i32>} : memref<1x1x8xf32, #tpu.memory_space<vmem>>, vector<1x1x8xf32>,
    %10 = arith.mulf %2, %2 : vector<512x8xf32>
    %cst_9 = arith.constant dense<0.000000e+00> : vector<8xf32>
    %11 = vector.multi_reduction <add>, %10, %cst_9 [0] : vector<512x8xf32> to vector<8xf32>
    %12 = vector.shape_cast %11 : vector<8xf32> to vector<1x8xf32>
    %c0_10 = arith.constant 0 : index
    %c0_11 = arith.constant 0 : index
    %c0_12 = arith.constant 0 : index
    %13 = vector.load %arg5[%c0_10, %c0_11, %c0_12] : memref<1x1x8xf32, #tpu.memory_space<vmem>>, vector<1x1x8xf32>
    %14 = vector.shape_cast %13 : vector<1x1x8xf32> to vector<1x8xf32>
    %15 = vector.shape_cast %12 : vector<1x8xf32> to vector<1x1x8xf32>
    tpu.vector_store %arg5[%c0_10, %c0_11, %c0_12], %15 {strides = array<i32>} : memref<1x1x8xf32, #tpu.memory_space<vmem>>, vector<1x1x8xf32>,
    return
  }
  func.func @transform_0(%arg0: i32) -> (i32, i32) {
    %c0_i32 = arith.constant 0 : i32
    %c0_i32_0 = arith.constant 0 : i32
    return %arg0, %c0_i32 : i32, i32
  }
  func.func @transform_1(%arg0: i32) -> (i32, i32) {
    %c0_i32 = arith.constant 0 : i32
    %c0_i32_0 = arith.constant 0 : i32
    %c0_i32_1 = arith.constant 0 : i32
    return %c0_i32, %c0_i32_0 : i32, i32
  }
  func.func @transform_2(%arg0: i32) -> (i32, i32) {
    %c0_i32 = arith.constant 0 : i32
    %c0_i32_0 = arith.constant 0 : i32
    return %arg0, %c0_i32 : i32, i32
  }
  func.func @transform_3(%arg0: i32) -> (i32, i32, i32) {
    %c0_i32 = arith.constant 0 : i32
    %c0_i32_0 = arith.constant 0 : i32
    %c0_i32_1 = arith.constant 0 : i32
    return %arg0, %c0_i32, %c0_i32_0 : i32, i32, i32
  }
  func.func @transform_4(%arg0: i32) -> (i32, i32, i32) {
    %c0_i32 = arith.constant 0 : i32
    %c0_i32_0 = arith.constant 0 : i32
    %c0_i32_1 = arith.constant 0 : i32
    return %arg0, %c0_i32, %c0_i32_0 : i32, i32, i32
  }
}

</mosaic_0001>

<llo_original>
// kernel: tpu_custom_call.1
$region0: #{tpu_custom_call.1}
  #allocation0 [shape = 'u32[]', space=smem, size = 0x4, offset = 0x4, fixed_abs, tag = 'smem constant byte address 0x4 - core index']
  #allocation1 [shape = 'u32[144,128]{1,0:T(1,128)}', space=vmem, size = 0x12000, scoped, tag = 'internal scratch']
  %s0 = inlined_call_operand.vmem [shape: bf16[512,36], index: 0, kind: input, shape index: {}]
  %s1 = inlined_call_operand.vmem [shape: bf16[36,8], index: 1, kind: input, shape index: {}]
  %s2 = inlined_call_operand.vmem [shape: bf16[512,8], index: 2, kind: output, shape index: {0}]
  %s3 = inlined_call_operand.hbm [shape: f32[1,1,8], index: 3, kind: output, shape index: {1}]
  %s4 = inlined_call_operand.hbm [shape: f32[1,1,8], index: 4, kind: output, shape index: {2}]
  %5 = xla_tuple %s2, %s3, %s4
  %s6 = sld [smem:[#allocation0]]
  $region34: #{tpu_custom_call.1} parent=0
    _
  %s8 = ssub.s32 1, %s6
  %s9 = scalar_select 0, %s8, %s6
  $region1: #{tpu_custom_call.1} parent=0
    #allocation2 [shape = 'u8[512]{0}', space=vmem, size = 0x400, scoped, tag = 'output window, operand 1, single buffered']
    #allocation3 [shape = 's32[1]{0}', space=sflag, size = 0x4, scoped, tag = 'scoped memory for tpu_custom_call.1']
    #allocation4 [shape = 'u8[512]{0}', space=vmem, size = 0x400, scoped, tag = 'output window, operand 2, single buffered']
    #allocation5 [shape = 's32[1]{0}', space=sflag, size = 0x4, scoped, tag = 'scoped memory for tpu_custom_call.1']
    %10 = vsyncpa [#allocation3], 0
    %11 = vsyncpa [#allocation5], 0
    // Predicated region
    $region2: #{tpu_custom_call.1} parent=1 // pred_check
      _
    $region3: #{tpu_custom_call.1} parent=1 // pred_check_branch
      %13 = sbr.rel (0) target = $region5
    $region4: #{tpu_custom_call.1} parent=1 // pred_region
      _
    $region5: #{tpu_custom_call.1} parent=1 // pred_fallthru
      _
    // Predicated region
    $region6: #{tpu_custom_call.1} parent=1 // pred_check
      _
    $region7: #{tpu_custom_call.1} parent=1 // pred_check_branch
      %15 = sbr.rel (0) target = $region9
    $region8: #{tpu_custom_call.1} parent=1 // pred_region
      _
    $region9: #{tpu_custom_call.1} parent=1 // pred_fallthru
      _
    %v17 = vld [vmem:[%s0] sm:$0xf]
    %v18 = vld [vmem:[%s0 + $0x4] sm:$0xf]
    %v19 = vld [vmem:[%s0 + $0x8] sm:$0xf]
    %v20 = vld [vmem:[%s0 + $0xc] sm:$0xf]
    %v21 = vld [vmem:[%s0 + $0x10] sm:$0xf]
    %v22 = vld [vmem:[%s0 + $0x14] sm:$0xf]
    %v23 = vld [vmem:[%s0 + $0x18] sm:$0xf]
    %v24 = vld [vmem:[%s0 + $0x1c] sm:$0xf]
    %v25 = vld [vmem:[%s0 + $0x20] sm:$0xf]
    %v26 = vld [vmem:[%s0 + $0x24] sm:$0xf]
    %v27 = vld [vmem:[%s0 + $0x28] sm:$0xf]
    %v28 = vld [vmem:[%s0 + $0x2c] sm:$0xf]
    %v29 = vld [vmem:[%s0 + $0x30] sm:$0xf]
    %v30 = vld [vmem:[%s0 + $0x34] sm:$0xf]
    %v31 = vld [vmem:[%s0 + $0x38] sm:$0xf]
    %v32 = vld [vmem:[%s0 + $0x3c] sm:$0xf]
    %v33 = vld [vmem:[%s0 + $0x40] sm:$0xf]
    %v34 = vld [vmem:[%s0 + $0x44] sm:$0xf]
    %v35 = vld [vmem:[%s0 + $0x48] sm:$0xf]
    %v36 = vld [vmem:[%s0 + $0x4c] sm:$0xf]
    %v37 = vld [vmem:[%s0 + $0x50] sm:$0xf]
    %v38 = vld [vmem:[%s0 + $0x54] sm:$0xf]
    %v39 = vld [vmem:[%s0 + $0x58] sm:$0xf]
    %v40 = vld [vmem:[%s0 + $0x5c] sm:$0xf]
    %v41 = vld [vmem:[%s0 + $0x60] sm:$0xf]
    %v42 = vld [vmem:[%s0 + $0x64] sm:$0xf]
    %v43 = vld [vmem:[%s0 + $0x68] sm:$0xf]
    %v44 = vld [vmem:[%s0 + $0x6c] sm:$0xf]
    %v45 = vld [vmem:[%s0 + $0x70] sm:$0xf]
    %v46 = vld [vmem:[%s0 + $0x74] sm:$0xf]
    %v47 = vld [vmem:[%s0 + $0x78] sm:$0xf]
    %v48 = vld [vmem:[%s0 + $0x7c] sm:$0xf]
    %v49 = vld [vmem:[%s0 + $0x80] sm:$0xf]
    %v50 = vld [vmem:[%s0 + $0x84] sm:$0xf]
    %v51 = vld [vmem:[%s0 + $0x88] sm:$0xf]
    %v52 = vld [vmem:[%s0 + $0x8c] sm:$0xf]
    %v53 = vld [vmem:[%s0 + $0x90] sm:$0xf]
    %v54 = vld [vmem:[%s0 + $0x94] sm:$0xf]
    %v55 = vld [vmem:[%s0 + $0x98] sm:$0xf]
    %v56 = vld [vmem:[%s0 + $0x9c] sm:$0xf]
    %v57 = vld [vmem:[%s0 + $0xa0] sm:$0xf]
    %v58 = vld [vmem:[%s0 + $0xa4] sm:$0xf]
    %v59 = vld [vmem:[%s0 + $0xa8] sm:$0xf]
    %v60 = vld [vmem:[%s0 + $0xac] sm:$0xf]
    %v61 = vld [vmem:[%s0 + $0xb0] sm:$0xf]
    %v62 = vld [vmem:[%s0 + $0xb4] sm:$0xf]
    %v63 = vld [vmem:[%s0 + $0xb8] sm:$0xf]
    %v64 = vld [vmem:[%s0 + $0xbc] sm:$0xf]
    %v65 = vld [vmem:[%s0 + $0xc0] sm:$0xf]
    %v66 = vld [vmem:[%s0 + $0xc4] sm:$0xf]
    %v67 = vld [vmem:[%s0 + $0xc8] sm:$0xf]
    %v68 = vld [vmem:[%s0 + $0xcc] sm:$0xf]
    %v69 = vld [vmem:[%s0 + $0xd0] sm:$0xf]
    %v70 = vld [vmem:[%s0 + $0xd4] sm:$0xf]
    %v71 = vld [vmem:[%s0 + $0xd8] sm:$0xf]
    %v72 = vld [vmem:[%s0 + $0xdc] sm:$0xf]
    %v73 = vld [vmem:[%s0 + $0xe0] sm:$0xf]
    %v74 = vld [vmem:[%s0 + $0xe4] sm:$0xf]
    %v75 = vld [vmem:[%s0 + $0xe8] sm:$0xf]
    %v76 = vld [vmem:[%s0 + $0xec] sm:$0xf]
    %v77 = vld [vmem:[%s0 + $0xf0] sm:$0xf]
    %v78 = vld [vmem:[%s0 + $0xf4] sm:$0xf]
    %v79 = vld [vmem:[%s0 + $0xf8] sm:$0xf]
    %v80 = vld [vmem:[%s0 + $0xfc] sm:$0xf]
    %v81 = vld [vmem:[%s1] sm:$0xf]
    %v82 = vld [vmem:[%s1 + $0x4] sm:$0xf]
    %v83 = vld [vmem:[%s1 + $0x8] sm:$0xf]
    %v84 = vld [vmem:[%s1 + $0xc] sm:$0xf]
    %v85 = vld [vmem:[%s1 + $0x10] sm:$0x3]
    %v150 = vunpack.c.l.b16 %v17
    %v151 = vunpack.c.l.b16 %v18
    %v152 = vunpack.c.l.b16 %v19
    %v153 = vunpack.c.l.b16 %v20
    %v154 = vunpack.c.l.b16 %v21
    %v155 = vunpack.c.l.b16 %v22
    %v156 = vunpack.c.l.b16 %v23
    %v157 = vunpack.c.l.b16 %v24
    %v158 = vunpack.c.l.b16 %v25
    %v159 = vunpack.c.l.b16 %v26
    %v160 = vunpack.c.l.b16 %v27
    %v161 = vunpack.c.l.b16 %v28
    %v162 = vunpack.c.l.b16 %v29
    %v163 = vunpack.c.l.b16 %v30
    %v164 = vunpack.c.l.b16 %v31
    %v165 = vunpack.c.l.b16 %v32
    %v166 = vunpack.c.l.b16 %v33
    %v167 = vunpack.c.l.b16 %v34
    %v168 = vunpack.c.l.b16 %v35
    %v169 = vunpack.c.l.b16 %v36
    %v170 = vunpack.c.l.b16 %v37
    %v171 = vunpack.c.l.b16 %v38
    %v172 = vunpack.c.l.b16 %v39
    %v173 = vunpack.c.l.b16 %v40
    %v174 = vunpack.c.l.b16 %v41
    %v175 = vunpack.c.l.b16 %v42
    %v176 = vunpack.c.l.b16 %v43
    %v177 = vunpack.c.l.b16 %v44
    %v178 = vunpack.c.l.b16 %v45
    %v179 = vunpack.c.l.b16 %v46
    %v180 = vunpack.c.l.b16 %v47
    %v181 = vunpack.c.l.b16 %v48
    %v182 = vunpack.c.l.b16 %v49
    %v183 = vunpack.c.l.b16 %v50
    %v184 = vunpack.c.l.b16 %v51
    %v185 = vunpack.c.l.b16 %v52
    %v186 = vunpack.c.l.b16 %v53
    %v187 = vunpack.c.l.b16 %v54
    %v188 = vunpack.c.l.b16 %v55
    %v189 = vunpack.c.l.b16 %v56
    %v190 = vunpack.c.l.b16 %v57
    %v191 = vunpack.c.l.b16 %v58
    %v192 = vunpack.c.l.b16 %v59
    %v193 = vunpack.c.l.b16 %v60
    %v194 = vunpack.c.l.b16 %v61
    %v195 = vunpack.c.l.b16 %v62
    %v196 = vunpack.c.l.b16 %v63
    %v197 = vunpack.c.l.b16 %v64
    %v198 = vunpack.c.l.b16 %v65
    %v199 = vunpack.c.l.b16 %v66
    %v200 = vunpack.c.l.b16 %v67
    %v201 = vunpack.c.l.b16 %v68
    %v202 = vunpack.c.l.b16 %v69
    %v203 = vunpack.c.l.b16 %v70
    %v204 = vunpack.c.l.b16 %v71
    %v205 = vunpack.c.l.b16 %v72
    %v206 = vunpack.c.l.b16 %v73
    %v207 = vunpack.c.l.b16 %v74
    %v208 = vunpack.c.l.b16 %v75
    %v209 = vunpack.c.l.b16 %v76
    %v210 = vunpack.c.l.b16 %v77
    %v211 = vunpack.c.l.b16 %v78
    %v212 = vunpack.c.l.b16 %v79
    %v213 = vunpack.c.l.b16 %v80
    %v214 = vpack.c.b16 %v151, %v150
    %v215 = vpack.c.b16 %v153, %v152
    %v216 = vpack.c.b16 %v155, %v154
    %v217 = vpack.c.b16 %v157, %v156
    %v218 = vpack.c.b16 %v159, %v158
    %v219 = vpack.c.b16 %v161, %v160
    %v220 = vpack.c.b16 %v163, %v162
    %v221 = vpack.c.b16 %v165, %v164
    %v222 = vpack.c.b16 %v167, %v166
    %v223 = vpack.c.b16 %v169, %v168
    %v224 = vpack.c.b16 %v171, %v170
    %v225 = vpack.c.b16 %v173, %v172
    %v226 = vpack.c.b16 %v175, %v174
    %v227 = vpack.c.b16 %v177, %v176
    %v228 = vpack.c.b16 %v179, %v178
    %v229 = vpack.c.b16 %v181, %v180
    %v230 = vpack.c.b16 %v183, %v182
    %v231 = vpack.c.b16 %v185, %v184
    %v232 = vpack.c.b16 %v187, %v186
    %v233 = vpack.c.b16 %v189, %v188
    %v234 = vpack.c.b16 %v191, %v190
    %v235 = vpack.c.b16 %v193, %v192
    %v236 = vpack.c.b16 %v195, %v194
    %v237 = vpack.c.b16 %v197, %v196
    %v238 = vpack.c.b16 %v199, %v198
    %v239 = vpack.c.b16 %v201, %v200
    %v240 = vpack.c.b16 %v203, %v202
    %v241 = vpack.c.b16 %v205, %v204
    %v242 = vpack.c.b16 %v207, %v206
    %v243 = vpack.c.b16 %v209, %v208
    %v244 = vpack.c.b16 %v211, %v210
    %v245 = vpack.c.b16 %v213, %v212
    %v251 = vunpack.c.l.b16 %v81
    %v252 = vunpack.c.l.b16 %v82
    %v253 = vunpack.c.l.b16 %v83
    %v254 = vunpack.c.l.b16 %v84
    %v255 = vunpack.c.l.b16 %v85
    %v256 = vpack.c.b16 %v252, %v251
    %v257 = vpack.c.b16 %v254, %v253
    %v258 = vpack.c.b16 %v255, %v255
    %vm261 = vcmask 293888
    %v263 = vsel %vm261, %v214, 0
    %v266 = vsel %vm261, %v215, 0
    %v269 = vsel %vm261, %v216, 0
    %v272 = vsel %vm261, %v217, 0
    %v275 = vsel %vm261, %v218, 0
    %v278 = vsel %vm261, %v219, 0
    %v281 = vsel %vm261, %v220, 0
    %v284 = vsel %vm261, %v221, 0
    %v287 = vsel %vm261, %v222, 0
    %v290 = vsel %vm261, %v223, 0
    %v293 = vsel %vm261, %v224, 0
    %v296 = vsel %vm261, %v225, 0
    %v299 = vsel %vm261, %v226, 0
    %v302 = vsel %vm261, %v227, 0
    %v305 = vsel %vm261, %v228, 0
    %v308 = vsel %vm261, %v229, 0
    %v311 = vsel %vm261, %v230, 0
    %v314 = vsel %vm261, %v231, 0
    %v317 = vsel %vm261, %v232, 0
    %v320 = vsel %vm261, %v233, 0
    %v323 = vsel %vm261, %v234, 0
    %v326 = vsel %vm261, %v235, 0
    %v329 = vsel %vm261, %v236, 0
    %v332 = vsel %vm261, %v237, 0
    %v335 = vsel %vm261, %v238, 0
    %v338 = vsel %vm261, %v239, 0
    %v341 = vsel %vm261, %v240, 0
    %v344 = vsel %vm261, %v241, 0
    %v347 = vsel %vm261, %v242, 0
    %v350 = vsel %vm261, %v243, 0
    %v353 = vsel %vm261, %v244, 0
    %v356 = vsel %vm261, %v245, 0
    %vm358 = vcmask 1041408
    %v360 = vsel %vm358, %v258, 0
    %362 = vmatprep.subr.bf16.mxu0 0
    %363 = vmatpush1.bf16.msra.mxu0 %v256
    %364 = vmatprep.subr.bf16.mxu0 0
    %365 = vmatpush1.bf16.msra.mxu0 %v257
    %366 = vmatprep.subr.bf16.mxu0 0
    %367 = vmatpush1.bf16.msra.mxu0 %v360
    %368 = vmatprep.subr.bf16.mxu0 0
    %369 = vmatpush1.bf16.msra.mxu0 0
    %370 = vmatprep.subr.bf16.mxu0 0
    %371 = vmatpush1.bf16.msra.mxu0 0
    %372 = vmatprep.subr.bf16.mxu0 0
    %373 = vmatpush1.bf16.msra.mxu0 0
    %374 = vmatprep.subr.bf16.mxu0 0
    %375 = vmatpush1.bf16.msra.mxu0 0
    %376 = vmatprep.subr.bf16.mxu0 0
    %377 = vmatpush1.bf16.msra.mxu0 0
    %378 = vmatprep.subr.bf16.mxu0 0
    %379 = vmatpush1.bf16.msra.mxu0 0
    %380 = vmatprep.subr.bf16.mxu0 0
    %381 = vmatpush1.bf16.msra.mxu0 0
    %382 = vmatprep.subr.bf16.mxu0 0
    %383 = vmatpush1.bf16.msra.mxu0 0
    %384 = vmatprep.subr.bf16.mxu0 0
    %385 = vmatpush1.bf16.msra.mxu0 0
    %386 = vmatprep.subr.bf16.mxu0 0
    %387 = vmatpush1.bf16.msra.mxu0 0
    %388 = vmatprep.subr.bf16.mxu0 0
    %389 = vmatpush1.bf16.msra.mxu0 0
    %390 = vmatprep.subr.bf16.mxu0 0
    %391 = vmatpush1.bf16.msra.mxu0 0
    %392 = vmatprep.subr.bf16.mxu0 0
    %393 = vmatpush1.bf16.msra.mxu0 0
    %394 = vmatprep.mubr.bf16.mxu0 0
    %395 = vmatmul.mubr.bf16.gmra.mrb[0].mxu0 %v263
    %v396 = vpop.f32.mrb[0].mxu0
    %v397 = vadd.f32 0.0, %v396
    %v398 = vpop.f32.mrb[0].mxu0
    %v399 = vpop.f32.mrb[0].mxu0
    %v400 = vadd.f32 0.0, %v399
    %v401 = vpop.f32.mrb[0].mxu0
    %402 = vmatprep.mubr.bf16.mxu0 0
    %403 = vmatmul.mubr.bf16.gmra.mrb[0].mxu0 %v266
    %v404 = vpop.f32.mrb[0].mxu0
    %v405 = vadd.f32 0.0, %v404
    %v406 = vpop.f32.mrb[0].mxu0
    %v407 = vpop.f32.mrb[0].mxu0
    %v408 = vadd.f32 0.0, %v407
    %v409 = vpop.f32.mrb[0].mxu0
    %410 = vmatprep.mubr.bf16.mxu0 0
    %411 = vmatmul.mubr.bf16.gmra.mrb[0].mxu0 %v269
    %v412 = vpop.f32.mrb[0].mxu0
    %v413 = vadd.f32 0.0, %v412
    %v414 = vpop.f32.mrb[0].mxu0
    %v415 = vpop.f32.mrb[0].mxu0
    %v416 = vadd.f32 0.0, %v415
    %v417 = vpop.f32.mrb[0].mxu0
    %418 = vmatprep.mubr.bf16.mxu0 0
    %419 = vmatmul.mubr.bf16.gmra.mrb[0].mxu0 %v272
    %v420 = vpop.f32.mrb[0].mxu0
    %v421 = vadd.f32 0.0, %v420
    %v422 = vpop.f32.mrb[0].mxu0
    %v423 = vpop.f32.mrb[0].mxu0
    %v424 = vadd.f32 0.0, %v423
    %v425 = vpop.f32.mrb[0].mxu0
    %426 = vmatprep.mubr.bf16.mxu0 0
    %427 = vmatmul.mubr.bf16.gmra.mrb[0].mxu0 %v275
    %v428 = vpop.f32.mrb[0].mxu0
    %v429 = vadd.f32 0.0, %v428
    %v430 = vpop.f32.mrb[0].mxu0
    %v431 = vpop.f32.mrb[0].mxu0
    %v432 = vadd.f32 0.0, %v431
    %v433 = vpop.f32.mrb[0].mxu0
    %434 = vmatprep.mubr.bf16.mxu0 0
    %435 = vmatmul.mubr.bf16.gmra.mrb[0].mxu0 %v278
    %v436 = vpop.f32.mrb[0].mxu0
    %v437 = vadd.f32 0.0, %v436
    %v438 = vpop.f32.mrb[0].mxu0
    %v439 = vpop.f32.mrb[0].mxu0
    %v440 = vadd.f32 0.0, %v439
    %v441 = vpop.f32.mrb[0].mxu0
    %442 = vmatprep.mubr.bf16.mxu0 0
    %443 = vmatmul.mubr.bf16.gmra.mrb[0].mxu0 %v281
    %v444 = vpop.f32.mrb[0].mxu0
    %v445 = vadd.f32 0.0, %v444
    %v446 = vpop.f32.mrb[0].mxu0
    %v447 = vpop.f32.mrb[0].mxu0
    %v448 = vadd.f32 0.0, %v447
    %v449 = vpop.f32.mrb[0].mxu0
    %450 = vmatprep.mubr.bf16.mxu0 0
    %451 = vmatmul.mubr.bf16.gmra.mrb[0].mxu0 %v284
    %v452 = vpop.f32.mrb[0].mxu0
    %v453 = vadd.f32 0.0, %v452
    %v454 = vpop.f32.mrb[0].mxu0
    %v455 = vpop.f32.mrb[0].mxu0
    %v456 = vadd.f32 0.0, %v455
    %v457 = vpop.f32.mrb[0].mxu0
    %458 = vmatprep.mubr.bf16.mxu0 0
    %459 = vmatmul.mubr.bf16.gmra.mrb[0].mxu0 %v287
    %v460 = vpop.f32.mrb[0].mxu0
    %v461 = vadd.f32 0.0, %v460
    %v462 = vpop.f32.mrb[0].mxu0
    %v463 = vpop.f32.mrb[0].mxu0
    %v464 = vadd.f32 0.0, %v463
    %v465 = vpop.f32.mrb[0].mxu0
    %466 = vmatprep.mubr.bf16.mxu0 0
    %467 = vmatmul.mubr.bf16.gmra.mrb[0].mxu0 %v290
    %v468 = vpop.f32.mrb[0].mxu0
    %v469 = vadd.f32 0.0, %v468
    %v470 = vpop.f32.mrb[0].mxu0
    %v471 = vpop.f32.mrb[0].mxu0
    %v472 = vadd.f32 0.0, %v471
    %v473 = vpop.f32.mrb[0].mxu0
    %474 = vmatprep.mubr.bf16.mxu0 0
    %475 = vmatmul.mubr.bf16.gmra.mrb[0].mxu0 %v293
    %v476 = vpop.f32.mrb[0].mxu0
    %v477 = vadd.f32 0.0, %v476
    %v478 = vpop.f32.mrb[0].mxu0
    %v479 = vpop.f32.mrb[0].mxu0
    %v480 = vadd.f32 0.0, %v479
    %v481 = vpop.f32.mrb[0].mxu0
    %482 = vmatprep.mubr.bf16.mxu0 0
    %483 = vmatmul.mubr.bf16.gmra.mrb[0].mxu0 %v296
    %v484 = vpop.f32.mrb[0].mxu0
    %v485 = vadd.f32 0.0, %v484
    %v486 = vpop.f32.mrb[0].mxu0
    %v487 = vpop.f32.mrb[0].mxu0
    %v488 = vadd.f32 0.0, %v487
    %v489 = vpop.f32.mrb[0].mxu0
    %490 = vmatprep.mubr.bf16.mxu0 0
    %491 = vmatmul.mubr.bf16.gmra.mrb[0].mxu0 %v299
    %v492 = vpop.f32.mrb[0].mxu0
    %v493 = vadd.f32 0.0, %v492
    %v494 = vpop.f32.mrb[0].mxu0
    %v495 = vpop.f32.mrb[0].mxu0
    %v496 = vadd.f32 0.0, %v495
    %v497 = vpop.f32.mrb[0].mxu0
    %498 = vmatprep.mubr.bf16.mxu0 0
    %499 = vmatmul.mubr.bf16.gmra.mrb[0].mxu0 %v302
    %v500 = vpop.f32.mrb[0].mxu0
    %v501 = vadd.f32 0.0, %v500
    %v502 = vpop.f32.mrb[0].mxu0
    %v503 = vpop.f32.mrb[0].mxu0
    %v504 = vadd.f32 0.0, %v503
    %v505 = vpop.f32.mrb[0].mxu0
    %506 = vmatprep.mubr.bf16.mxu0 0
    %507 = vmatmul.mubr.bf16.gmra.mrb[0].mxu0 %v305
    %v508 = vpop.f32.mrb[0].mxu0
    %v509 = vadd.f32 0.0, %v508
    %v510 = vpop.f32.mrb[0].mxu0
    %v511 = vpop.f32.mrb[0].mxu0
    %v512 = vadd.f32 0.0, %v511
    %v513 = vpop.f32.mrb[0].mxu0
    %514 = vmatprep.mubr.bf16.mxu0 0
    %515 = vmatmul.mubr.bf16.gmra.mrb[0].mxu0 %v308
    %v516 = vpop.f32.mrb[0].mxu0
    %v517 = vadd.f32 0.0, %v516
    %v518 = vpop.f32.mrb[0].mxu0
    %v519 = vpop.f32.mrb[0].mxu0
    %v520 = vadd.f32 0.0, %v519
    %v521 = vpop.f32.mrb[0].mxu0
    %522 = vmatprep.mubr.bf16.mxu0 0
    %523 = vmatmul.mubr.bf16.gmra.mrb[0].mxu0 %v311
    %v524 = vpop.f32.mrb[0].mxu0
    %v525 = vadd.f32 0.0, %v524
    %v526 = vpop.f32.mrb[0].mxu0
    %v527 = vpop.f32.mrb[0].mxu0
    %v528 = vadd.f32 0.0, %v527
    %v529 = vpop.f32.mrb[0].mxu0
    %530 = vmatprep.mubr.bf16.mxu0 0
    %531 = vmatmul.mubr.bf16.gmra.mrb[0].mxu0 %v314
    %v532 = vpop.f32.mrb[0].mxu0
    %v533 = vadd.f32 0.0, %v532
    %v534 = vpop.f32.mrb[0].mxu0
    %v535 = vpop.f32.mrb[0].mxu0
    %v536 = vadd.f32 0.0, %v535
    %v537 = vpop.f32.mrb[0].mxu0
    %538 = vmatprep.mubr.bf16.mxu0 0
    %539 = vmatmul.mubr.bf16.gmra.mrb[0].mxu0 %v317
    %v540 = vpop.f32.mrb[0].mxu0
    %v541 = vadd.f32 0.0, %v540
    %v542 = vpop.f32.mrb[0].mxu0
    %v543 = vpop.f32.mrb[0].mxu0
    %v544 = vadd.f32 0.0, %v543
    %v545 = vpop.f32.mrb[0].mxu0
    %546 = vmatprep.mubr.bf16.mxu0 0
    %547 = vmatmul.mubr.bf16.gmra.mrb[0].mxu0 %v320
    %v548 = vpop.f32.mrb[0].mxu0
    %v549 = vadd.f32 0.0, %v548
    %v550 = vpop.f32.mrb[0].mxu0
    %v551 = vpop.f32.mrb[0].mxu0
    %v552 = vadd.f32 0.0, %v551
    %v553 = vpop.f32.mrb[0].mxu0
    %554 = vmatprep.mubr.bf16.mxu0 0
    %555 = vmatmul.mubr.bf16.gmra.mrb[0].mxu0 %v323
    %v556 = vpop.f32.mrb[0].mxu0
    %v557 = vadd.f32 0.0, %v556
    %v558 = vpop.f32.mrb[0].mxu0
    %v559 = vpop.f32.mrb[0].mxu0
    %v560 = vadd.f32 0.0, %v559
    %v561 = vpop.f32.mrb[0].mxu0
    %562 = vmatprep.mubr.bf16.mxu0 0
    %563 = vmatmul.mubr.bf16.gmra.mrb[0].mxu0 %v326
    %v564 = vpop.f32.mrb[0].mxu0
    %v565 = vadd.f32 0.0, %v564
    %v566 = vpop.f32.mrb[0].mxu0
    %v567 = vpop.f32.mrb[0].mxu0
    %v568 = vadd.f32 0.0, %v567
    %v569 = vpop.f32.mrb[0].mxu0
    %570 = vmatprep.mubr.bf16.mxu0 0
    %571 = vmatmul.mubr.bf16.gmra.mrb[0].mxu0 %v329
    %v572 = vpop.f32.mrb[0].mxu0
    %v573 = vadd.f32 0.0, %v572
    %v574 = vpop.f32.mrb[0].mxu0
    %v575 = vpop.f32.mrb[0].mxu0
    %v576 = vadd.f32 0.0, %v575
    %v577 = vpop.f32.mrb[0].mxu0
    %578 = vmatprep.mubr.bf16.mxu0 0
    %579 = vmatmul.mubr.bf16.gmra.mrb[0].mxu0 %v332
    %v580 = vpop.f32.mrb[0].mxu0
    %v581 = vadd.f32 0.0, %v580
    %v582 = vpop.f32.mrb[0].mxu0
    %v583 = vpop.f32.mrb[0].mxu0
    %v584 = vadd.f32 0.0, %v583
    %v585 = vpop.f32.mrb[0].mxu0
    %586 = vmatprep.mubr.bf16.mxu0 0
    %587 = vmatmul.mubr.bf16.gmra.mrb[0].mxu0 %v335
    %v588 = vpop.f32.mrb[0].mxu0
    %v589 = vadd.f32 0.0, %v588
    %v590 = vpop.f32.mrb[0].mxu0
    %v591 = vpop.f32.mrb[0].mxu0
    %v592 = vadd.f32 0.0, %v591
    %v593 = vpop.f32.mrb[0].mxu0
    %594 = vmatprep.mubr.bf16.mxu0 0
    %595 = vmatmul.mubr.bf16.gmra.mrb[0].mxu0 %v338
    %v596 = vpop.f32.mrb[0].mxu0
    %v597 = vadd.f32 0.0, %v596
    %v598 = vpop.f32.mrb[0].mxu0
    %v599 = vpop.f32.mrb[0].mxu0
    %v600 = vadd.f32 0.0, %v599
    %v601 = vpop.f32.mrb[0].mxu0
    %602 = vmatprep.mubr.bf16.mxu0 0
    %603 = vmatmul.mubr.bf16.gmra.mrb[0].mxu0 %v341
    %v604 = vpop.f32.mrb[0].mxu0
    %v605 = vadd.f32 0.0, %v604
    %v606 = vpop.f32.mrb[0].mxu0
    %v607 = vpop.f32.mrb[0].mxu0
    %v608 = vadd.f32 0.0, %v607
    %v609 = vpop.f32.mrb[0].mxu0
    %610 = vmatprep.mubr.bf16.mxu0 0
    %611 = vmatmul.mubr.bf16.gmra.mrb[0].mxu0 %v344
    %v612 = vpop.f32.mrb[0].mxu0
    %v613 = vadd.f32 0.0, %v612
    %v614 = vpop.f32.mrb[0].mxu0
    %v615 = vpop.f32.mrb[0].mxu0
    %v616 = vadd.f32 0.0, %v615
    %v617 = vpop.f32.mrb[0].mxu0
    %618 = vmatprep.mubr.bf16.mxu0 0
    %619 = vmatmul.mubr.bf16.gmra.mrb[0].mxu0 %v347
    %v620 = vpop.f32.mrb[0].mxu0
    %v621 = vadd.f32 0.0, %v620
    %v622 = vpop.f32.mrb[0].mxu0
    %v623 = vpop.f32.mrb[0].mxu0
    %v624 = vadd.f32 0.0, %v623
    %v625 = vpop.f32.mrb[0].mxu0
    %626 = vmatprep.mubr.bf16.mxu0 0
    %627 = vmatmul.mubr.bf16.gmra.mrb[0].mxu0 %v350
    %v628 = vpop.f32.mrb[0].mxu0
    %v629 = vadd.f32 0.0, %v628
    %v630 = vpop.f32.mrb[0].mxu0
    %v631 = vpop.f32.mrb[0].mxu0
    %v632 = vadd.f32 0.0, %v631
    %v633 = vpop.f32.mrb[0].mxu0
    %634 = vmatprep.mubr.bf16.mxu0 0
    %635 = vmatmul.mubr.bf16.gmra.mrb[0].mxu0 %v353
    %v636 = vpop.f32.mrb[0].mxu0
    %v637 = vadd.f32 0.0, %v636
    %v638 = vpop.f32.mrb[0].mxu0
    %v639 = vpop.f32.mrb[0].mxu0
    %v640 = vadd.f32 0.0, %v639
    %v641 = vpop.f32.mrb[0].mxu0
    %642 = vmatprep.mubr.bf16.mxu0 0
    %643 = vmatmul.mubr.bf16.gmra.mrb[0].mxu0 %v356
    %v644 = vpop.f32.mrb[0].mxu0
    %v645 = vadd.f32 0.0, %v644
    %v646 = vpop.f32.mrb[0].mxu0
    %v647 = vpop.f32.mrb[0].mxu0
    %v648 = vadd.f32 0.0, %v647
    %v649 = vpop.f32.mrb[0].mxu0
    %650 = vdwg.mxu0
    %v651 = vpack.c.bf16 %v400, %v397
    %v652 = vpack.c.bf16 %v408, %v405
    %v653 = vpack.c.bf16 %v416, %v413
    %v654 = vpack.c.bf16 %v424, %v421
    %v655 = vpack.c.bf16 %v432, %v429
    %v656 = vpack.c.bf16 %v440, %v437
    %v657 = vpack.c.bf16 %v448, %v445
    %v658 = vpack.c.bf16 %v456, %v453
    %v659 = vpack.c.bf16 %v464, %v461
    %v660 = vpack.c.bf16 %v472, %v469
    %v661 = vpack.c.bf16 %v480, %v477
    %v662 = vpack.c.bf16 %v488, %v485
    %v663 = vpack.c.bf16 %v496, %v493
    %v664 = vpack.c.bf16 %v504, %v501
    %v665 = vpack.c.bf16 %v512, %v509
    %v666 = vpack.c.bf16 %v520, %v517
    %v667 = vpack.c.bf16 %v528, %v525
    %v668 = vpack.c.bf16 %v536, %v533
    %v669 = vpack.c.bf16 %v544, %v541
    %v670 = vpack.c.bf16 %v552, %v549
    %v671 = vpack.c.bf16 %v560, %v557
    %v672 = vpack.c.bf16 %v568, %v565
    %v673 = vpack.c.bf16 %v576, %v573
    %v674 = vpack.c.bf16 %v584, %v581
    %v675 = vpack.c.bf16 %v592, %v589
    %v676 = vpack.c.bf16 %v600, %v597
    %v677 = vpack.c.bf16 %v608, %v605
    %v678 = vpack.c.bf16 %v616, %v613
    %v679 = vpack.c.bf16 %v624, %v621
    %v680 = vpack.c.bf16 %v632, %v629
    %v681 = vpack.c.bf16 %v640, %v637
    %v682 = vpack.c.bf16 %v648, %v645
    %v715 = vunpack.c.l.b16 %v651
    %v716 = vunpack.c.h.b16 %v651
    %v717 = vunpack.c.l.b16 %v652
    %v718 = vunpack.c.h.b16 %v652
    %v719 = vunpack.c.l.b16 %v653
    %v720 = vunpack.c.h.b16 %v653
    %v721 = vunpack.c.l.b16 %v654
    %v722 = vunpack.c.h.b16 %v654
    %v723 = vunpack.c.l.b16 %v655
    %v724 = vunpack.c.h.b16 %v655
    %v725 = vunpack.c.l.b16 %v656
    %v726 = vunpack.c.h.b16 %v656
    %v727 = vunpack.c.l.b16 %v657
    %v728 = vunpack.c.h.b16 %v657
    %v729 = vunpack.c.l.b16 %v658
    %v730 = vunpack.c.h.b16 %v658
    %v731 = vunpack.c.l.b16 %v659
    %v732 = vunpack.c.h.b16 %v659
    %v733 = vunpack.c.l.b16 %v660
    %v734 = vunpack.c.h.b16 %v660
    %v735 = vunpack.c.l.b16 %v661
    %v736 = vunpack.c.h.b16 %v661
    %v737 = vunpack.c.l.b16 %v662
    %v738 = vunpack.c.h.b16 %v662
    %v739 = vunpack.c.l.b16 %v663
    %v740 = vunpack.c.h.b16 %v663
    %v741 = vunpack.c.l.b16 %v664
    %v742 = vunpack.c.h.b16 %v664
    %v743 = vunpack.c.l.b16 %v665
    %v744 = vunpack.c.h.b16 %v665
    %v745 = vunpack.c.l.b16 %v666
    %v746 = vunpack.c.h.b16 %v666
    %v747 = vunpack.c.l.b16 %v667
    %v748 = vunpack.c.h.b16 %v667
    %v749 = vunpack.c.l.b16 %v668
    %v750 = vunpack.c.h.b16 %v668
    %v751 = vunpack.c.l.b16 %v669
    %v752 = vunpack.c.h.b16 %v669
    %v753 = vunpack.c.l.b16 %v670
    %v754 = vunpack.c.h.b16 %v670
    %v755 = vunpack.c.l.b16 %v671
    %v756 = vunpack.c.h.b16 %v671
    %v757 = vunpack.c.l.b16 %v672
    %v758 = vunpack.c.h.b16 %v672
    %v759 = vunpack.c.l.b16 %v673
    %v760 = vunpack.c.h.b16 %v673
    %v761 = vunpack.c.l.b16 %v674
    %v762 = vunpack.c.h.b16 %v674
    %v763 = vunpack.c.l.b16 %v675
    %v764 = vunpack.c.h.b16 %v675
    %v765 = vunpack.c.l.b16 %v676
    %v766 = vunpack.c.h.b16 %v676
    %v767 = vunpack.c.l.b16 %v677
    %v768 = vunpack.c.h.b16 %v677
    %v769 = vunpack.c.l.b16 %v678
    %v770 = vunpack.c.h.b16 %v678
    %v771 = vunpack.c.l.b16 %v679
    %v772 = vunpack.c.h.b16 %v679
    %v773 = vunpack.c.l.b16 %v680
    %v774 = vunpack.c.h.b16 %v680
    %v775 = vunpack.c.l.b16 %v681
    %v776 = vunpack.c.h.b16 %v681
    %v777 = vunpack.c.l.b16 %v682
    %v778 = vunpack.c.h.b16 %v682
    %v779 = vpack.c.b16 %v715, %v715
    %v780 = vpack.c.b16 %v716, %v716
    %v781 = vpack.c.b16 %v717, %v717
    %v782 = vpack.c.b16 %v718, %v718
    %v783 = vpack.c.b16 %v719, %v719
    %v784 = vpack.c.b16 %v720, %v720
    %v785 = vpack.c.b16 %v721, %v721
    %v786 = vpack.c.b16 %v722, %v722
    %v787 = vpack.c.b16 %v723, %v723
    %v788 = vpack.c.b16 %v724, %v724
    %v789 = vpack.c.b16 %v725, %v725
    %v790 = vpack.c.b16 %v726, %v726
    %v791 = vpack.c.b16 %v727, %v727
    %v792 = vpack.c.b16 %v728, %v728
    %v793 = vpack.c.b16 %v729, %v729
    %v794 = vpack.c.b16 %v730, %v730
    %v795 = vpack.c.b16 %v731, %v731
    %v796 = vpack.c.b16 %v732, %v732
    %v797 = vpack.c.b16 %v733, %v733
    %v798 = vpack.c.b16 %v734, %v734
    %v799 = vpack.c.b16 %v735, %v735
    %v800 = vpack.c.b16 %v736, %v736
    %v801 = vpack.c.b16 %v737, %v737
    %v802 = vpack.c.b16 %v738, %v738
    %v803 = vpack.c.b16 %v739, %v739
    %v804 = vpack.c.b16 %v740, %v740
    %v805 = vpack.c.b16 %v741, %v741
    %v806 = vpack.c.b16 %v742, %v742
    %v807 = vpack.c.b16 %v743, %v743
    %v808 = vpack.c.b16 %v744, %v744
    %v809 = vpack.c.b16 %v745, %v745
    %v810 = vpack.c.b16 %v746, %v746
    %v811 = vpack.c.b16 %v747, %v747
    %v812 = vpack.c.b16 %v748, %v748
    %v813 = vpack.c.b16 %v749, %v749
    %v814 = vpack.c.b16 %v750, %v750
    %v815 = vpack.c.b16 %v751, %v751
    %v816 = vpack.c.b16 %v752, %v752
    %v817 = vpack.c.b16 %v753, %v753
    %v818 = vpack.c.b16 %v754, %v754
    %v819 = vpack.c.b16 %v755, %v755
    %v820 = vpack.c.b16 %v756, %v756
    %v821 = vpack.c.b16 %v757, %v757
    %v822 = vpack.c.b16 %v758, %v758
    %v823 = vpack.c.b16 %v759, %v759
    %v824 = vpack.c.b16 %v760, %v760
    %v825 = vpack.c.b16 %v761, %v761
    %v826 = vpack.c.b16 %v762, %v762
    %v827 = vpack.c.b16 %v763, %v763
    %v828 = vpack.c.b16 %v764, %v764
    %v829 = vpack.c.b16 %v765, %v765
    %v830 = vpack.c.b16 %v766, %v766
    %v831 = vpack.c.b16 %v767, %v767
    %v832 = vpack.c.b16 %v768, %v768
    %v833 = vpack.c.b16 %v769, %v769
    %v834 = vpack.c.b16 %v770, %v770
    %v835 = vpack.c.b16 %v771, %v771
    %v836 = vpack.c.b16 %v772, %v772
    %v837 = vpack.c.b16 %v773, %v773
    %v838 = vpack.c.b16 %v774, %v774
    %v839 = vpack.c.b16 %v775, %v775
    %v840 = vpack.c.b16 %v776, %v776
    %v841 = vpack.c.b16 %v777, %v777
    %v842 = vpack.c.b16 %v778, %v778
    %vm907 = vcmask 60416
    %908 = vst.msk [vmem:[%s2] sm:$0xf] %vm907, %v779
    %909 = vst.msk [vmem:[%s2 + $0x4] sm:$0xf] %vm907, %v780
    %910 = vst.msk [vmem:[%s2 + $0x8] sm:$0xf] %vm907, %v781
    %911 = vst.msk [vmem:[%s2 + $0xc] sm:$0xf] %vm907, %v782
    %912 = vst.msk [vmem:[%s2 + $0x10] sm:$0xf] %vm907, %v783
    %913 = vst.msk [vmem:[%s2 + $0x14] sm:$0xf] %vm907, %v784
    %914 = vst.msk [vmem:[%s2 + $0x18] sm:$0xf] %vm907, %v785
    %915 = vst.msk [vmem:[%s2 + $0x1c] sm:$0xf] %vm907, %v786
    %916 = vst.msk [vmem:[%s2 + $0x20] sm:$0xf] %vm907, %v787
    %917 = vst.msk [vmem:[%s2 + $0x24] sm:$0xf] %vm907, %v788
    %918 = vst.msk [vmem:[%s2 + $0x28] sm:$0xf] %vm907, %v789
    %919 = vst.msk [vmem:[%s2 + $0x2c] sm:$0xf] %vm907, %v790
    %920 = vst.msk [vmem:[%s2 + $0x30] sm:$0xf] %vm907, %v791
    %921 = vst.msk [vmem:[%s2 + $0x34] sm:$0xf] %vm907, %v792
    %922 = vst.msk [vmem:[%s2 + $0x38] sm:$0xf] %vm907, %v793
    %923 = vst.msk [vmem:[%s2 + $0x3c] sm:$0xf] %vm907, %v794
    %924 = vst.msk [vmem:[%s2 + $0x40] sm:$0xf] %vm907, %v795
    %925 = vst.msk [vmem:[%s2 + $0x44] sm:$0xf] %vm907, %v796
    %926 = vst.msk [vmem:[%s2 + $0x48] sm:$0xf] %vm907, %v797
    %927 = vst.msk [vmem:[%s2 + $0x4c] sm:$0xf] %vm907, %v798
    %928 = vst.msk [vmem:[%s2 + $0x50] sm:$0xf] %vm907, %v799
    %929 = vst.msk [vmem:[%s2 + $0x54] sm:$0xf] %vm907, %v800
    %930 = vst.msk [vmem:[%s2 + $0x58] sm:$0xf] %vm907, %v801
    %931 = vst.msk [vmem:[%s2 + $0x5c] sm:$0xf] %vm907, %v802
    %932 = vst.msk [vmem:[%s2 + $0x60] sm:$0xf] %vm907, %v803
    %933 = vst.msk [vmem:[%s2 + $0x64] sm:$0xf] %vm907, %v804
    %934 = vst.msk [vmem:[%s2 + $0x68] sm:$0xf] %vm907, %v805
    %935 = vst.msk [vmem:[%s2 + $0x6c] sm:$0xf] %vm907, %v806
    %936 = vst.msk [vmem:[%s2 + $0x70] sm:$0xf] %vm907, %v807
    %937 = vst.msk [vmem:[%s2 + $0x74] sm:$0xf] %vm907, %v808
    %938 = vst.msk [vmem:[%s2 + $0x78] sm:$0xf] %vm907, %v809
    %939 = vst.msk [vmem:[%s2 + $0x7c] sm:$0xf] %vm907, %v810
    %940 = vst.msk [vmem:[%s2 + $0x80] sm:$0xf] %vm907, %v811
    %941 = vst.msk [vmem:[%s2 + $0x84] sm:$0xf] %vm907, %v812
    %942 = vst.msk [vmem:[%s2 + $0x88] sm:$0xf] %vm907, %v813
    %943 = vst.msk [vmem:[%s2 + $0x8c] sm:$0xf] %vm907, %v814
    %944 = vst.msk [vmem:[%s2 + $0x90] sm:$0xf] %vm907, %v815
    %945 = vst.msk [vmem:[%s2 + $0x94] sm:$0xf] %vm907, %v816
    %946 = vst.msk [vmem:[%s2 + $0x98] sm:$0xf] %vm907, %v817
    %947 = vst.msk [vmem:[%s2 + $0x9c] sm:$0xf] %vm907, %v818
    %948 = vst.msk [vmem:[%s2 + $0xa0] sm:$0xf] %vm907, %v819
    %949 = vst.msk [vmem:[%s2 + $0xa4] sm:$0xf] %vm907, %v820
    %950 = vst.msk [vmem:[%s2 + $0xa8] sm:$0xf] %vm907, %v821
    %951 = vst.msk [vmem:[%s2 + $0xac] sm:$0xf] %vm907, %v822
    %952 = vst.msk [vmem:[%s2 + $0xb0] sm:$0xf] %vm907, %v823
    %953 = vst.msk [vmem:[%s2 + $0xb4] sm:$0xf] %vm907, %v824
    %954 = vst.msk [vmem:[%s2 + $0xb8] sm:$0xf] %vm907, %v825
    %955 = vst.msk [vmem:[%s2 + $0xbc] sm:$0xf] %vm907, %v826
    %956 = vst.msk [vmem:[%s2 + $0xc0] sm:$0xf] %vm907, %v827
    %957 = vst.msk [vmem:[%s2 + $0xc4] sm:$0xf] %vm907, %v828
    %958 = vst.msk [vmem:[%s2 + $0xc8] sm:$0xf] %vm907, %v829
    %959 = vst.msk [vmem:[%s2 + $0xcc] sm:$0xf] %vm907, %v830
    %960 = vst.msk [vmem:[%s2 + $0xd0] sm:$0xf] %vm907, %v831
    %961 = vst.msk [vmem:[%s2 + $0xd4] sm:$0xf] %vm907, %v832
    %962 = vst.msk [vmem:[%s2 + $0xd8] sm:$0xf] %vm907, %v833
    %963 = vst.msk [vmem:[%s2 + $0xdc] sm:$0xf] %vm907, %v834
    %964 = vst.msk [vmem:[%s2 + $0xe0] sm:$0xf] %vm907, %v835
    %965 = vst.msk [vmem:[%s2 + $0xe4] sm:$0xf] %vm907, %v836
    %966 = vst.msk [vmem:[%s2 + $0xe8] sm:$0xf] %vm907, %v837
    %967 = vst.msk [vmem:[%s2 + $0xec] sm:$0xf] %vm907, %v838
    %968 = vst.msk [vmem:[%s2 + $0xf0] sm:$0xf] %vm907, %v839
    %969 = vst.msk [vmem:[%s2 + $0xf4] sm:$0xf] %vm907, %v840
    %970 = vst.msk [vmem:[%s2 + $0xf8] sm:$0xf] %vm907, %v841
    %971 = vst.msk [vmem:[%s2 + $0xfc] sm:$0xf] %vm907, %v842
    %vm972 = vcmask 64512
    %v973 = vsel %vm972, %v397, 0.0
    %v974 = vsel %vm972, %v400, 0.0
    %v975 = vadd.f32 %v973, %v974
    %v976 = vsel %vm972, %v405, 0.0
    %v977 = vadd.f32 %v975, %v976
    %v978 = vsel %vm972, %v408, 0.0
    %v979 = vadd.f32 %v977, %v978
    %v980 = vsel %vm972, %v413, 0.0
    %v981 = vadd.f32 %v979, %v980
    %v982 = vsel %vm972, %v416, 0.0
    %v983 = vadd.f32 %v981, %v982
    %v984 = vsel %vm972, %v421, 0.0
    %v985 = vadd.f32 %v983, %v984
    %v986 = vsel %vm972, %v424, 0.0
    %v987 = vadd.f32 %v985, %v986
    %v988 = vsel %vm972, %v429, 0.0
    %v989 = vadd.f32 %v987, %v988
    %v990 = vsel %vm972, %v432, 0.0
    %v991 = vadd.f32 %v989, %v990
    %v992 = vsel %vm972, %v437, 0.0
    %v993 = vadd.f32 %v991, %v992
    %v994 = vsel %vm972, %v440, 0.0
    %v995 = vadd.f32 %v993, %v994
    %v996 = vsel %vm972, %v445, 0.0
    %v997 = vadd.f32 %v995, %v996
    %v998 = vsel %vm972, %v448, 0.0
    %v999 = vadd.f32 %v997, %v998
    %v1000 = vsel %vm972, %v453, 0.0
    %v1001 = vadd.f32 %v999, %v1000
    %v1002 = vsel %vm972, %v456, 0.0
    %v1003 = vadd.f32 %v1001, %v1002
    %v1004 = vsel %vm972, %v461, 0.0
    %v1005 = vadd.f32 %v1003, %v1004
    %v1006 = vsel %vm972, %v464, 0.0
    %v1007 = vadd.f32 %v1005, %v1006
    %v1008 = vsel %vm972, %v469, 0.0
    %v1009 = vadd.f32 %v1007, %v1008
    %v1010 = vsel %vm972, %v472, 0.0
    %v1011 = vadd.f32 %v1009, %v1010
    %v1012 = vsel %vm972, %v477, 0.0
    %v1013 = vadd.f32 %v1011, %v1012
    %v1014 = vsel %vm972, %v480, 0.0
    %v1015 = vadd.f32 %v1013, %v1014
    %v1016 = vsel %vm972, %v485, 0.0
    %v1017 = vadd.f32 %v1015, %v1016
    %v1018 = vsel %vm972, %v488, 0.0
    %v1019 = vadd.f32 %v1017, %v1018
    %v1020 = vsel %vm972, %v493, 0.0
    %v1021 = vadd.f32 %v1019, %v1020
    %v1022 = vsel %vm972, %v496, 0.0
    %v1023 = vadd.f32 %v1021, %v1022
    %v1024 = vsel %vm972, %v501, 0.0
    %v1025 = vadd.f32 %v1023, %v1024
    %v1026 = vsel %vm972, %v504, 0.0
    %v1027 = vadd.f32 %v1025, %v1026
    %v1028 = vsel %vm972, %v509, 0.0
    %v1029 = vadd.f32 %v1027, %v1028
    %v1030 = vsel %vm972, %v512, 0.0
    %v1031 = vadd.f32 %v1029, %v1030
    %v1032 = vsel %vm972, %v517, 0.0
    %v1033 = vadd.f32 %v1031, %v1032
    %v1034 = vsel %vm972, %v520, 0.0
    %v1035 = vadd.f32 %v1033, %v1034
    %v1036 = vsel %vm972, %v525, 0.0
    %v1037 = vadd.f32 %v1035, %v1036
    %v1038 = vsel %vm972, %v528, 0.0
    %v1039 = vadd.f32 %v1037, %v1038
    %v1040 = vsel %vm972, %v533, 0.0
    %v1041 = vadd.f32 %v1039, %v1040
    %v1042 = vsel %vm972, %v536, 0.0
    %v1043 = vadd.f32 %v1041, %v1042
    %v1044 = vsel %vm972, %v541, 0.0
    %v1045 = vadd.f32 %v1043, %v1044
    %v1046 = vsel %vm972, %v544, 0.0
    %v1047 = vadd.f32 %v1045, %v1046
    %v1048 = vsel %vm972, %v549, 0.0
    %v1049 = vadd.f32 %v1047, %v1048
    %v1050 = vsel %vm972, %v552, 0.0
    %v1051 = vadd.f32 %v1049, %v1050
    %v1052 = vsel %vm972, %v557, 0.0
    %v1053 = vadd.f32 %v1051, %v1052
    %v1054 = vsel %vm972, %v560, 0.0
    %v1055 = vadd.f32 %v1053, %v1054
    %v1056 = vsel %vm972, %v565, 0.0
    %v1057 = vadd.f32 %v1055, %v1056
    %v1058 = vsel %vm972, %v568, 0.0
    %v1059 = vadd.f32 %v1057, %v1058
    %v1060 = vsel %vm972, %v573, 0.0
    %v1061 = vadd.f32 %v1059, %v1060
    %v1062 = vsel %vm972, %v576, 0.0
    %v1063 = vadd.f32 %v1061, %v1062
    %v1064 = vsel %vm972, %v581, 0.0
    %v1065 = vadd.f32 %v1063, %v1064
    %v1066 = vsel %vm972, %v584, 0.0
    %v1067 = vadd.f32 %v1065, %v1066
    %v1068 = vsel %vm972, %v589, 0.0
    %v1069 = vadd.f32 %v1067, %v1068
    %v1070 = vsel %vm972, %v592, 0.0
    %v1071 = vadd.f32 %v1069, %v1070
    %v1072 = vsel %vm972, %v597, 0.0
    %v1073 = vadd.f32 %v1071, %v1072
    %v1074 = vsel %vm972, %v600, 0.0
    %v1075 = vadd.f32 %v1073, %v1074
    %v1076 = vsel %vm972, %v605, 0.0
    %v1077 = vadd.f32 %v1075, %v1076
    %v1078 = vsel %vm972, %v608, 0.0
    %v1079 = vadd.f32 %v1077, %v1078
    %v1080 = vsel %vm972, %v613, 0.0
    %v1081 = vadd.f32 %v1079, %v1080
    %v1082 = vsel %vm972, %v616, 0.0
    %v1083 = vadd.f32 %v1081, %v1082
    %v1084 = vsel %vm972, %v621, 0.0
    %v1085 = vadd.f32 %v1083, %v1084
    %v1086 = vsel %vm972, %v624, 0.0
    %v1087 = vadd.f32 %v1085, %v1086
    %v1088 = vsel %vm972, %v629, 0.0
    %v1089 = vadd.f32 %v1087, %v1088
    %v1090 = vsel %vm972, %v632, 0.0
    %v1091 = vadd.f32 %v1089, %v1090
    %v1092 = vsel %vm972, %v637, 0.0
    %v1093 = vadd.f32 %v1091, %v1092
    %v1094 = vsel %vm972, %v640, 0.0
    %v1095 = vadd.f32 %v1093, %v1094
    %v1096 = vsel %vm972, %v645, 0.0
    %v1097 = vadd.f32 %v1095, %v1096
    %v1098 = vsel %vm972, %v648, 0.0
    %v1099 = vadd.f32 %v1097, %v1098
    %v1100 = vrot.slane %v1099, 4
    %v1101 = vadd.f32 %v1099, %v1100
    %v1102 = vrot.slane %v1101, 2
    %v1103 = vadd.f32 %v1101, %v1102
    %v1104 = vrot.slane %v1103, 1
    %v1105 = vadd.f32 %v1103, %v1104
    %vm1106 = vcmask 57344
    %1107 = vst.msk [vmem:[#allocation2] sm:$0x1] %vm1106, %v1105
    %v1108 = vmul.f32 %v397, %v397
    %v1109 = vmul.f32 %v400, %v400
    %v1110 = vmul.f32 %v405, %v405
    %v1111 = vmul.f32 %v408, %v408
    %v1112 = vmul.f32 %v413, %v413
    %v1113 = vmul.f32 %v416, %v416
    %v1114 = vmul.f32 %v421, %v421
    %v1115 = vmul.f32 %v424, %v424
    %v1116 = vmul.f32 %v429, %v429
    %v1117 = vmul.f32 %v432, %v432
    %v1118 = vmul.f32 %v437, %v437
    %v1119 = vmul.f32 %v440, %v440
    %v1120 = vmul.f32 %v445, %v445
    %v1121 = vmul.f32 %v448, %v448
    %v1122 = vmul.f32 %v453, %v453
    %v1123 = vmul.f32 %v456, %v456
    %v1124 = vmul.f32 %v461, %v461
    %v1125 = vmul.f32 %v464, %v464
    %v1126 = vmul.f32 %v469, %v469
    %v1127 = vmul.f32 %v472, %v472
    %v1128 = vmul.f32 %v477, %v477
    %v1129 = vmul.f32 %v480, %v480
    %v1130 = vmul.f32 %v485, %v485
    %v1131 = vmul.f32 %v488, %v488
    %v1132 = vmul.f32 %v493, %v493
    %v1133 = vmul.f32 %v496, %v496
    %v1134 = vmul.f32 %v501, %v501
    %v1135 = vmul.f32 %v504, %v504
    %v1136 = vmul.f32 %v509, %v509
    %v1137 = vmul.f32 %v512, %v512
    %v1138 = vmul.f32 %v517, %v517
    %v1139 = vmul.f32 %v520, %v520
    %v1140 = vmul.f32 %v525, %v525
    %v1141 = vmul.f32 %v528, %v528
    %v1142 = vmul.f32 %v533, %v533
    %v1143 = vmul.f32 %v536, %v536
    %v1144 = vmul.f32 %v541, %v541
    %v1145 = vmul.f32 %v544, %v544
    %v1146 = vmul.f32 %v549, %v549
    %v1147 = vmul.f32 %v552, %v552
    %v1148 = vmul.f32 %v557, %v557
    %v1149 = vmul.f32 %v560, %v560
    %v1150 = vmul.f32 %v565, %v565
    %v1151 = vmul.f32 %v568, %v568
    %v1152 = vmul.f32 %v573, %v573
    %v1153 = vmul.f32 %v576, %v576
    %v1154 = vmul.f32 %v581, %v581
    %v1155 = vmul.f32 %v584, %v584
    %v1156 = vmul.f32 %v589, %v589
    %v1157 = vmul.f32 %v592, %v592
    %v1158 = vmul.f32 %v597, %v597
    %v1159 = vmul.f32 %v600, %v600
    %v1160 = vmul.f32 %v605, %v605
    %v1161 = vmul.f32 %v608, %v608
    %v1162 = vmul.f32 %v613, %v613
    %v1163 = vmul.f32 %v616, %v616
    %v1164 = vmul.f32 %v621, %v621
    %v1165 = vmul.f32 %v624, %v624
    %v1166 = vmul.f32 %v629, %v629
    %v1167 = vmul.f32 %v632, %v632
    %v1168 = vmul.f32 %v637, %v637
    %v1169 = vmul.f32 %v640, %v640
    %v1170 = vmul.f32 %v645, %v645
    %v1171 = vmul.f32 %v648, %v648
    %v1172 = vsel %vm972, %v1108, 0.0
    %v1173 = vsel %vm972, %v1109, 0.0
    %v1174 = vadd.f32 %v1172, %v1173
    %v1175 = vsel %vm972, %v1110, 0.0
    %v1176 = vadd.f32 %v1174, %v1175
    %v1177 = vsel %vm972, %v1111, 0.0
    %v1178 = vadd.f32 %v1176, %v1177
    %v1179 = vsel %vm972, %v1112, 0.0
    %v1180 = vadd.f32 %v1178, %v1179
    %v1181 = vsel %vm972, %v1113, 0.0
    %v1182 = vadd.f32 %v1180, %v1181
    %v1183 = vsel %vm972, %v1114, 0.0
    %v1184 = vadd.f32 %v1182, %v1183
    %v1185 = vsel %vm972, %v1115, 0.0
    %v1186 = vadd.f32 %v1184, %v1185
    %v1187 = vsel %vm972, %v1116, 0.0
    %v1188 = vadd.f32 %v1186, %v1187
    %v1189 = vsel %vm972, %v1117, 0.0
    %v1190 = vadd.f32 %v1188, %v1189
    %v1191 = vsel %vm972, %v1118, 0.0
    %v1192 = vadd.f32 %v1190, %v1191
    %v1193 = vsel %vm972, %v1119, 0.0
    %v1194 = vadd.f32 %v1192, %v1193
    %v1195 = vsel %vm972, %v1120, 0.0
    %v1196 = vadd.f32 %v1194, %v1195
    %v1197 = vsel %vm972, %v1121, 0.0
    %v1198 = vadd.f32 %v1196, %v1197
    %v1199 = vsel %vm972, %v1122, 0.0
    %v1200 = vadd.f32 %v1198, %v1199
    %v1201 = vsel %vm972, %v1123, 0.0
    %v1202 = vadd.f32 %v1200, %v1201
    %v1203 = vsel %vm972, %v1124, 0.0
    %v1204 = vadd.f32 %v1202, %v1203
    %v1205 = vsel %vm972, %v1125, 0.0
    %v1206 = vadd.f32 %v1204, %v1205
    %v1207 = vsel %vm972, %v1126, 0.0
    %v1208 = vadd.f32 %v1206, %v1207
    %v1209 = vsel %vm972, %v1127, 0.0
    %v1210 = vadd.f32 %v1208, %v1209
    %v1211 = vsel %vm972, %v1128, 0.0
    %v1212 = vadd.f32 %v1210, %v1211
    %v1213 = vsel %vm972, %v1129, 0.0
    %v1214 = vadd.f32 %v1212, %v1213
    %v1215 = vsel %vm972, %v1130, 0.0
    %v1216 = vadd.f32 %v1214, %v1215
    %v1217 = vsel %vm972, %v1131, 0.0
    %v1218 = vadd.f32 %v1216, %v1217
    %v1219 = vsel %vm972, %v1132, 0.0
    %v1220 = vadd.f32 %v1218, %v1219
    %v1221 = vsel %vm972, %v1133, 0.0
    %v1222 = vadd.f32 %v1220, %v1221
    %v1223 = vsel %vm972, %v1134, 0.0
    %v1224 = vadd.f32 %v1222, %v1223
    %v1225 = vsel %vm972, %v1135, 0.0
    %v1226 = vadd.f32 %v1224, %v1225
    %v1227 = vsel %vm972, %v1136, 0.0
    %v1228 = vadd.f32 %v1226, %v1227
    %v1229 = vsel %vm972, %v1137, 0.0
    %v1230 = vadd.f32 %v1228, %v1229
    %v1231 = vsel %vm972, %v1138, 0.0
    %v1232 = vadd.f32 %v1230, %v1231
    %v1233 = vsel %vm972, %v1139, 0.0
    %v1234 = vadd.f32 %v1232, %v1233
    %v1235 = vsel %vm972, %v1140, 0.0
    %v1236 = vadd.f32 %v1234, %v1235
    %v1237 = vsel %vm972, %v1141, 0.0
    %v1238 = vadd.f32 %v1236, %v1237
    %v1239 = vsel %vm972, %v1142, 0.0
    %v1240 = vadd.f32 %v1238, %v1239
    %v1241 = vsel %vm972, %v1143, 0.0
    %v1242 = vadd.f32 %v1240, %v1241
    %v1243 = vsel %vm972, %v1144, 0.0
    %v1244 = vadd.f32 %v1242, %v1243
    %v1245 = vsel %vm972, %v1145, 0.0
    %v1246 = vadd.f32 %v1244, %v1245
    %v1247 = vsel %vm972, %v1146, 0.0
    %v1248 = vadd.f32 %v1246, %v1247
    %v1249 = vsel %vm972, %v1147, 0.0
    %v1250 = vadd.f32 %v1248, %v1249
    %v1251 = vsel %vm972, %v1148, 0.0
    %v1252 = vadd.f32 %v1250, %v1251
    %v1253 = vsel %vm972, %v1149, 0.0
    %v1254 = vadd.f32 %v1252, %v1253
    %v1255 = vsel %vm972, %v1150, 0.0
    %v1256 = vadd.f32 %v1254, %v1255
    %v1257 = vsel %vm972, %v1151, 0.0
    %v1258 = vadd.f32 %v1256, %v1257
    %v1259 = vsel %vm972, %v1152, 0.0
    %v1260 = vadd.f32 %v1258, %v1259
    %v1261 = vsel %vm972, %v1153, 0.0
    %v1262 = vadd.f32 %v1260, %v1261
    %v1263 = vsel %vm972, %v1154, 0.0
    %v1264 = vadd.f32 %v1262, %v1263
    %v1265 = vsel %vm972, %v1155, 0.0
    %v1266 = vadd.f32 %v1264, %v1265
    %v1267 = vsel %vm972, %v1156, 0.0
    %v1268 = vadd.f32 %v1266, %v1267
    %v1269 = vsel %vm972, %v1157, 0.0
    %v1270 = vadd.f32 %v1268, %v1269
    %v1271 = vsel %vm972, %v1158, 0.0
    %v1272 = vadd.f32 %v1270, %v1271
    %v1273 = vsel %vm972, %v1159, 0.0
    %v1274 = vadd.f32 %v1272, %v1273
    %v1275 = vsel %vm972, %v1160, 0.0
    %v1276 = vadd.f32 %v1274, %v1275
    %v1277 = vsel %vm972, %v1161, 0.0
    %v1278 = vadd.f32 %v1276, %v1277
    %v1279 = vsel %vm972, %v1162, 0.0
    %v1280 = vadd.f32 %v1278, %v1279
    %v1281 = vsel %vm972, %v1163, 0.0
    %v1282 = vadd.f32 %v1280, %v1281
    %v1283 = vsel %vm972, %v1164, 0.0
    %v1284 = vadd.f32 %v1282, %v1283
    %v1285 = vsel %vm972, %v1165, 0.0
    %v1286 = vadd.f32 %v1284, %v1285
    %v1287 = vsel %vm972, %v1166, 0.0
    %v1288 = vadd.f32 %v1286, %v1287
    %v1289 = vsel %vm972, %v1167, 0.0
    %v1290 = vadd.f32 %v1288, %v1289
    %v1291 = vsel %vm972, %v1168, 0.0
    %v1292 = vadd.f32 %v1290, %v1291
    %v1293 = vsel %vm972, %v1169, 0.0
    %v1294 = vadd.f32 %v1292, %v1293
    %v1295 = vsel %vm972, %v1170, 0.0
    %v1296 = vadd.f32 %v1294, %v1295
    %v1297 = vsel %vm972, %v1171, 0.0
    %v1298 = vadd.f32 %v1296, %v1297
    %v1299 = vrot.slane %v1298, 4
    %v1300 = vadd.f32 %v1298, %v1299
    %v1301 = vrot.slane %v1300, 2
    %v1302 = vadd.f32 %v1300, %v1301
    %v1303 = vrot.slane %v1302, 1
    %v1304 = vadd.f32 %v1302, %v1303
    %1305 = vst.msk [vmem:[#allocation4] sm:$0x1] %vm1106, %v1304
    // Predicated region
    $region10: #{tpu_custom_call.1} parent=1 // pred_check
      _
    $region11: #{tpu_custom_call.1} parent=1 // pred_check_branch
      %1307 = sbr.rel (0) target = $region13
    $region12: #{tpu_custom_call.1} parent=1 // pred_region
      _
    $region13: #{tpu_custom_call.1} parent=1 // pred_fallthru
      _
    // Predicated region
    $region14: #{tpu_custom_call.1} parent=1 // pred_check
      _
    $region15: #{tpu_custom_call.1} parent=1 // pred_check_branch
      %1309 = sbr.rel (0) target = $region17
    $region16: #{tpu_custom_call.1} parent=1 // pred_region
      %s1311 = ssub.s32 16, 16
      %1312 = vsyncadd [#allocation3], %s1311
      %s1314 = sshll.u32 [#allocation2], 4
      %s1315 = int_to_ptr.vmem [resolvable:$true] %s1314
      %1317 = dma.vmem_to_hbm [thread:$0]  %s1315, 16, %s3, [#allocation3]
    $region17: #{tpu_custom_call.1} parent=1 // pred_fallthru
      _
    // Predicated region
    $region18: #{tpu_custom_call.1} parent=1 // pred_check
      _
    $region19: #{tpu_custom_call.1} parent=1 // pred_check_branch
      %1319 = sbr.rel (0) target = $region21
    $region20: #{tpu_custom_call.1} parent=1 // pred_region
      %s1321 = ssub.s32 16, 16
      %1322 = vsyncadd [#allocation5], %s1321
      %s1324 = sshll.u32 [#allocation4], 4
      %s1325 = int_to_ptr.vmem [resolvable:$true] %s1324
      %1327 = dma.vmem_to_hbm [thread:$0]  %s1325, 16, %s4, [#allocation5]
    $region21: #{tpu_custom_call.1} parent=1 // pred_fallthru
      _
    // Predicated region
    $region22: #{tpu_custom_call.1} parent=1 // pred_check
      _
    $region23: #{tpu_custom_call.1} parent=1 // pred_check_branch
      %1329 = sbr.rel (0) target = $region25
    $region24: #{tpu_custom_call.1} parent=1 // pred_region
      _
    $region25: #{tpu_custom_call.1} parent=1 // pred_fallthru
      _
    // Predicated region
    $region26: #{tpu_custom_call.1} parent=1 // pred_check
      _
    $region27: #{tpu_custom_call.1} parent=1 // pred_check_branch
      %1331 = sbr.rel (0) target = $region29
    $region28: #{tpu_custom_call.1} parent=1 // pred_region
      %1332 = dma.done [#allocation3], 16
    $region29: #{tpu_custom_call.1} parent=1 // pred_fallthru
      _
    // Predicated region
    $region30: #{tpu_custom_call.1} parent=1 // pred_check
      _
    $region31: #{tpu_custom_call.1} parent=1 // pred_check_branch
      %1334 = sbr.rel (0) target = $region33
    $region32: #{tpu_custom_call.1} parent=1 // pred_region
      %1335 = dma.done [#allocation5], 16
    $region33: #{tpu_custom_call.1} parent=1 // pred_fallthru
      _
    %1336 = vsyncpa [#allocation3], 1
    %1337 = vsyncpa [#allocation5], 1

</llo_original>
